<compile_context>
chip_gen: v7x
topology: tpu7x:2x2x1
jax: 0.10.0
libtpu: 0.0.40
codegen_flags: <defaults>
</compile_context>

<pallas_src>
from functools import partial

import jax
import jax.numpy as jnp
from jax.experimental import pallas as pl
from jax.experimental.pallas import tpu as pltpu


def _round_up(x: int, m: int) -> int:
    return ((x + m - 1) // m) * m


def _ff_kernel_resident(x_ref, w1_ref, b1_ref, w2_ref, b2_ref, o_ref):
    # x_ref : (TM, dmp)        row tile (streamed, double-buffered)
    # w1_ref: (dmp, dep)       pre-transposed, VMEM-resident
    # b1_ref: (1, dep)
    # w2_ref: (dep, dmp)       pre-transposed, VMEM-resident
    # b2_ref: (1, dmp)
    # o_ref : (TM, dmp)
    x = x_ref[...]
    h = jnp.dot(x, w1_ref[...], preferred_element_type=jnp.float32)
    h = h + b1_ref[...]
    # Keep the second matmul in the activation dtype (fast MXU path for bf16 acts).
    h = h.astype(x.dtype)
    y = jnp.dot(h, w2_ref[...], preferred_element_type=jnp.float32)
    y = y + b2_ref[...]
    # Dropout (eval mode) is identity; ReLU is the final op of the Sequential.
    o_ref[...] = jnp.maximum(y, 0.0).astype(o_ref.dtype)


def _ff_kernel_chunked(x_ref, w1_ref, b1_ref, w2_ref, b2_ref, o_ref, acc_ref):
    # Grid = (row tiles, d_embed chunks); d_embed chunk axis is the reduction axis.
    # x_ref : (TM, dmp)        resident across the k loop (constant block index)
    # w1_ref: (dmp, TK)        streamed chunk of w1.T
    # b1_ref: (1, TK)
    # w2_ref: (TK, dmp)        streamed chunk of w2.T
    # b2_ref: (1, dmp)
    # o_ref : (TM, dmp)
    # acc_ref: (TM, dmp) f32 scratch accumulator
    k = pl.program_id(1)

    @pl.when(k == 0)
    def _():
        acc_ref[...] = jnp.zeros_like(acc_ref)

    x = x_ref[...]
    h = jnp.dot(x, w1_ref[...], preferred_element_type=jnp.float32)
    h = h + b1_ref[...]
    h = h.astype(x.dtype)
    acc_ref[...] += jnp.dot(h, w2_ref[...], preferred_element_type=jnp.float32)

    @pl.when(k == pl.num_programs(1) - 1)
    def _():
        y = acc_ref[...] + b2_ref[...]
        o_ref[...] = jnp.maximum(y, 0.0).astype(o_ref.dtype)


@partial(jax.jit, static_argnames=("force_chunked",))
def position_wise_ff(x, w1, b1, w2, b2, force_chunked=False):
    """x: (..., d_model). Torch nn.Linear parameter layouts:
       w1: (d_embed, d_model), b1: (d_embed,),
       w2: (d_model, d_embed), b2: (d_model,)."""
    d_model = x.shape[-1]
    d_embed = w1.shape[0]
    orig_shape = x.shape
    out_dtype = x.dtype

    xm = x.reshape(-1, d_model)
    M = xm.shape[0]

    # Lane-align feature dims to 128 (unmasked stores, well-filled MXU passes).
    dmp = _round_up(d_model, 128)
    dep = _round_up(d_embed, 128)

    # Row tile: no M padding; ragged last block is handled by a cdiv grid.
    # Guarantee >=2 row tiles for mid-size M so both v7x TensorCores get work.
    if M >= 512:
        TM = 512
    elif M >= 16:
        TM = _round_up(pl.cdiv(M, 2), 8)
    elif M >= 8:
        TM = 8
    else:
        TM = M
    grid_m = pl.cdiv(M, TM)

    # Per-TensorCore VMEM capacity / working budget.
    try:
        vmem_cap = int(pltpu.get_tpu_info().vmem_capacity_bytes)
    except Exception:
        vmem_cap = 64 << 20  # conservative: v7x per-TC VMEM
    vmem_budget = int(vmem_cap * 0.75)

    w_isz = jnp.dtype(w1.dtype).itemsize
    x_isz = jnp.dtype(out_dtype).itemsize

    def resident_need(tm):
        return (2 * dep * dmp * w_isz + (dep + dmp) * w_isz   # resident weights + biases
                + 4 * tm * dmp * x_isz                        # x + out tiles, double-buffered
                + tm * dep * 4 + tm * dmp * 4)                # f32 intermediates

    def chunked_need(tm, tk):
        return (4 * tk * dmp * w_isz + 2 * tk * w_isz + dmp * w_isz  # dbl-buffered weight chunks + biases
                + 4 * tm * dmp * x_isz                               # x + out tiles
                + tm * dmp * 4                                       # accumulator scratch
                + tm * tk * 4 + tm * dmp * 4)                        # f32 intermediates

    TK_TARGET = 2048
    need_resident = resident_need(TM)
    weight_bytes = 2 * dep * dmp * w_isz
    act_bytes = 2 * M * dmp * x_isz
    # Fail over to the chunked path when resident weights don't fit the budget, or
    # when the kernel would be dominated by a single blocking weight DMA (small M).
    use_chunked = bool(force_chunked) or (need_resident > vmem_budget) or (
        dep > TK_TARGET and weight_bytes > 4 * act_bytes)

    if use_chunked:
        TK = min(TK_TARGET, dep)
        while chunked_need(TM, TK) > vmem_budget and TK > 256:
            TK = max(256, TK // 2)
        while chunked_need(TM, TK) > vmem_budget and TM > 64:
            TM = max(64, _round_up(TM // 2, 8))
        grid_m = pl.cdiv(M, TM)
        grid_k = pl.cdiv(dep, TK)
        # Balance chunk size so TK * grid_k barely exceeds dep (minimal zero padding).
        TK = _round_up(pl.cdiv(dep, grid_k), 128)
        dep_pad = TK * grid_k
        need = chunked_need(TM, TK)
    else:
        dep_pad = dep
        need = need_resident

    # Feature-dim zero padding is exact: padded d_model cols / d_embed slots
    # contribute nothing (weights/biases padded with zeros) and padded output
    # columns are sliced off below.  Pre-transpose weights once so both in-kernel
    # matmuls are standard contractions.
    if dmp != d_model:
        xm = jnp.pad(xm, ((0, 0), (0, dmp - d_model)))
    w1t = jnp.pad(w1.T, ((0, dmp - d_model), (0, dep_pad - d_embed)))   # (dmp, dep_pad)
    w2t = jnp.pad(w2.T, ((0, dep_pad - d_embed), (0, dmp - d_model)))   # (dep_pad, dmp)
    b1r = jnp.pad(b1, ((0, dep_pad - d_embed),)).reshape(1, dep_pad)
    b2r = jnp.pad(b2, ((0, dmp - d_model),)).reshape(1, dmp)

    vmem_limit = min(int(vmem_cap * 0.9), max(int(need * 1.3), 32 << 20))

    cost = pl.CostEstimate(
        flops=int(4 * M * dmp * dep_pad),
        transcendentals=0,
        bytes_accessed=int(2 * M * dmp * x_isz + 2 * dep_pad * dmp * w_isz
                           + (dep_pad + dmp) * w_isz),
    )

    if not use_chunked:
        out = pl.pallas_call(
            _ff_kernel_resident,
            out_shape=jax.ShapeDtypeStruct((M, dmp), out_dtype),
            grid_spec=pltpu.PrefetchScalarGridSpec(
                num_scalar_prefetch=0,
                grid=(grid_m,),
                in_specs=[
                    pl.BlockSpec((TM, dmp), lambda i: (i, 0)),        # x: streamed rows
                    pl.BlockSpec((dmp, dep_pad), lambda i: (0, 0)),   # w1.T: VMEM-resident
                    pl.BlockSpec((1, dep_pad), lambda i: (0, 0)),     # b1
                    pl.BlockSpec((dep_pad, dmp), lambda i: (0, 0)),   # w2.T: VMEM-resident
                    pl.BlockSpec((1, dmp), lambda i: (0, 0)),         # b2
                ],
                out_specs=pl.BlockSpec((TM, dmp), lambda i: (i, 0)),
            ),
            compiler_params=pltpu.CompilerParams(
                dimension_semantics=("parallel",),
                vmem_limit_bytes=vmem_limit,
            ),
            cost_estimate=cost,
        )(xm, w1t, b1r, w2t, b2r)
    else:
        out = pl.pallas_call(
            _ff_kernel_chunked,
            out_shape=jax.ShapeDtypeStruct((M, dmp), out_dtype),
            grid_spec=pltpu.PrefetchScalarGridSpec(
                num_scalar_prefetch=0,
                grid=(grid_m, grid_k),
                in_specs=[
                    pl.BlockSpec((TM, dmp), lambda i, k: (i, 0)),     # x: resident over k
                    pl.BlockSpec((dmp, TK), lambda i, k: (0, k)),     # w1.T chunk (pipelined)
                    pl.BlockSpec((1, TK), lambda i, k: (0, k)),       # b1 chunk
                    pl.BlockSpec((TK, dmp), lambda i, k: (k, 0)),     # w2.T chunk (pipelined)
                    pl.BlockSpec((1, dmp), lambda i, k: (0, 0)),      # b2
                ],
                out_specs=pl.BlockSpec((TM, dmp), lambda i, k: (i, 0)),
                scratch_shapes=[pltpu.VMEM((TM, dmp), jnp.float32)],
            ),
            compiler_params=pltpu.CompilerParams(
                dimension_semantics=("parallel", "arbitrary"),
                vmem_limit_bytes=vmem_limit,
            ),
            cost_estimate=cost,
        )(xm, w1t, b1r, w2t, b2r)

    return out[:, :d_model].reshape(orig_shape)


if __name__ == "__main__":
    # Small shapes consistent with the module: x is (batch, seq, d_model).
    batch, seq, d_model, d_embed = 2, 8, 32, 64

    key = jax.random.PRNGKey(0)
    kx, kw1, kb1, kw2, kb2 = jax.random.split(key, 5)

    x = jax.random.normal(kx, (batch, seq, d_model), dtype=jnp.float32)

    # Deterministic parameters mirroring nn.Linear shapes:
    #   Linear(d_model, d_embed): weight (d_embed, d_model), bias (d_embed,)
    #   Linear(d_embed, d_model): weight (d_model, d_embed), bias (d_model,)
    bound1 = 1.0 / (d_model ** 0.5)
    bound2 = 1.0 / (d_embed ** 0.5)
    w1 = jax.random.uniform(kw1, (d_embed, d_model), jnp.float32, -bound1, bound1)
    b1 = jax.random.uniform(kb1, (d_embed,), jnp.float32, -bound1, bound1)
    w2 = jax.random.uniform(kw2, (d_model, d_embed), jnp.float32, -bound2, bound2)
    b2 = jax.random.uniform(kb2, (d_model,), jnp.float32, -bound2, bound2)

    # Reference in plain JAX (dropout in eval mode = identity).
    ref = jnp.maximum(
        (x.reshape(-1, d_model) @ w1.T + b1) @ w2.T + b2, 0.0
    ).reshape(x.shape)

    # Resident-weights path (default for these small shapes).
    y = position_wise_ff(x, w1, b1, w2, b2)
    jax.block_until_ready(y)
    assert y.shape == x.shape
    # Tolerance accommodates MXU default-precision (bf16-pass) matmuls vs the XLA
    # reference; structural bugs would produce O(1) errors.
    assert jnp.allclose(y, ref, atol=2e-2, rtol=2e-2)

    # Also exercise the d_embed-chunked fallback path (used for large weights / v7x).
    y_chk = position_wise_ff(x, w1, b1, w2, b2, force_chunked=True)
    jax.block_until_ready(y_chk)
    assert y_chk.shape == x.shape
    assert jnp.allclose(y_chk, ref, atol=2e-2, rtol=2e-2)

    print("KERNEL_OK")
</pallas_src>

<mosaic_0001>
module attributes {stable_mosaic.version = 11 : i64} {
  func.func @_ff_kernel_resident(%arg0: i32, %arg1: memref<8x128xf32, #tpu.memory_space<vmem>>, %arg2: memref<128x128xf32, #tpu.memory_space<vmem>>, %arg3: memref<1x128xf32, #tpu.memory_space<vmem>>, %arg4: memref<128x128xf32, #tpu.memory_space<vmem>>, %arg5: memref<1x128xf32, #tpu.memory_space<vmem>>, %arg6: memref<8x128xf32, #tpu.memory_space<vmem>>) attributes {dimension_semantics = [#tpu.dimension_semantics<parallel>], iteration_bounds = array<i64: 2>, scalar_prefetch = 0 : i64, scratch_operands = 0 : i64, tpu.core_type = #tpu.core_type<tc>, window_params = [{transform_indices = @transform_0, window_bounds = array<i64: 8, 128>}, {pipeline_mode = #tpu.pipeline_mode<synchronous>, transform_indices = @transform_1, window_bounds = array<i64: 128, 128>}, {pipeline_mode = #tpu.pipeline_mode<synchronous>, transform_indices = @transform_2, window_bounds = array<i64: 1, 128>}, {pipeline_mode = #tpu.pipeline_mode<synchronous>, transform_indices = @transform_3, window_bounds = array<i64: 128, 128>}, {pipeline_mode = #tpu.pipeline_mode<synchronous>, transform_indices = @transform_4, window_bounds = array<i64: 1, 128>}, {transform_indices = @transform_5, window_bounds = array<i64: 8, 128>}]} {
    %c0 = arith.constant 0 : index
    %c0_0 = arith.constant 0 : index
    %0 = vector.load %arg1[%c0, %c0_0] : memref<8x128xf32, #tpu.memory_space<vmem>>, vector<8x128xf32>
    %c0_1 = arith.constant 0 : index
    %c0_2 = arith.constant 0 : index
    %1 = vector.load %arg2[%c0_1, %c0_2] : memref<128x128xf32, #tpu.memory_space<vmem>>, vector<128x128xf32>
    %cst = arith.constant dense<0.000000e+00> : vector<8x128xf32>
    %2 = tpu.matmul %0, %1, %cst {dimension_numbers = #tpu.dot_dimension_numbers<[1], [0], [0], [1], [0, 0, 1, 1], [], []>} : vector<8x128xf32>, vector<128x128xf32>, vector<8x128xf32> -> vector<8x128xf32>
    %c0_3 = arith.constant 0 : index
    %c0_4 = arith.constant 0 : index
    %3 = vector.load %arg3[%c0_3, %c0_4] : memref<1x128xf32, #tpu.memory_space<vmem>>, vector<1x128xf32>
    %4 = vector.broadcast %3 : vector<1x128xf32> to vector<8x128xf32>
    %5 = arith.addf %2, %4 : vector<8x128xf32>
    %c0_5 = arith.constant 0 : index
    %c0_6 = arith.constant 0 : index
    %6 = vector.load %arg4[%c0_5, %c0_6] : memref<128x128xf32, #tpu.memory_space<vmem>>, vector<128x128xf32>
    %cst_7 = arith.constant dense<0.000000e+00> : vector<8x128xf32>
    %7 = tpu.matmul %5, %6, %cst_7 {dimension_numbers = #tpu.dot_dimension_numbers<[1], [0], [0], [1], [0, 0, 1, 1], [], []>} : vector<8x128xf32>, vector<128x128xf32>, vector<8x128xf32> -> vector<8x128xf32>
    %c0_8 = arith.constant 0 : index
    %c0_9 = arith.constant 0 : index
    %8 = vector.load %arg5[%c0_8, %c0_9] : memref<1x128xf32, #tpu.memory_space<vmem>>, vector<1x128xf32>
    %9 = vector.broadcast %8 : vector<1x128xf32> to vector<8x128xf32>
    %10 = arith.addf %7, %9 : vector<8x128xf32>
    %cst_10 = arith.constant 0.000000e+00 : f32
    %11 = vector.broadcast %cst_10 : f32 to vector<8x128xf32>
    %12 = arith.maximumf %10, %11 : vector<8x128xf32>
    %c0_11 = arith.constant 0 : index
    %c0_12 = arith.constant 0 : index
    %13 = vector.load %arg6[%c0_11, %c0_12] : memref<8x128xf32, #tpu.memory_space<vmem>>, vector<8x128xf32>
    tpu.vector_store %arg6[%c0_11, %c0_12], %12 {strides = array<i32>} : memref<8x128xf32, #tpu.memory_space<vmem>>, vector<8x128xf32>,
    return
  }
  func.func @transform_0(%arg0: i32) -> (i32, i32) {
    %c0_i32 = arith.constant 0 : i32
    %c0_i32_0 = arith.constant 0 : i32
    return %arg0, %c0_i32 : i32, i32
  }
  func.func @transform_1(%arg0: i32) -> (i32, i32) {
    %c0_i32 = arith.constant 0 : i32
    %c0_i32_0 = arith.constant 0 : i32
    %c0_i32_1 = arith.constant 0 : i32
    return %c0_i32, %c0_i32_0 : i32, i32
  }
  func.func @transform_2(%arg0: i32) -> (i32, i32) {
    %c0_i32 = arith.constant 0 : i32
    %c0_i32_0 = arith.constant 0 : i32
    %c0_i32_1 = arith.constant 0 : i32
    return %c0_i32, %c0_i32_0 : i32, i32
  }
  func.func @transform_3(%arg0: i32) -> (i32, i32) {
    %c0_i32 = arith.constant 0 : i32
    %c0_i32_0 = arith.constant 0 : i32
    %c0_i32_1 = arith.constant 0 : i32
    return %c0_i32, %c0_i32_0 : i32, i32
  }
  func.func @transform_4(%arg0: i32) -> (i32, i32) {
    %c0_i32 = arith.constant 0 : i32
    %c0_i32_0 = arith.constant 0 : i32
    %c0_i32_1 = arith.constant 0 : i32
    return %c0_i32, %c0_i32_0 : i32, i32
  }
  func.func @transform_5(%arg0: i32) -> (i32, i32) {
    %c0_i32 = arith.constant 0 : i32
    %c0_i32_0 = arith.constant 0 : i32
    return %arg0, %c0_i32 : i32, i32
  }
}

</mosaic_0001>

<llo_original>
// kernel: position_wise_ff.1
$region0: #{position_wise_ff.1}
  #allocation0 [shape = 'u32[]', space=smem, size = 0x4, offset = 0x4, fixed_abs, tag = 'smem constant byte address 0x4 - core index']
  #allocation1 [shape = 'u32[144,128]{1,0:T(1,128)}', space=vmem, size = 0x12000, scoped, tag = 'internal scratch']
  %s0 = inlined_call_operand.vmem [shape: f32[16,128], index: 0, kind: input, shape index: {}]
  %s1 = inlined_call_operand.vmem [shape: f32[128,128], index: 1, kind: input, shape index: {}]
  %s2 = inlined_call_operand.vmem [shape: f32[1,128], index: 2, kind: input, shape index: {}]
  %s3 = inlined_call_operand.vmem [shape: f32[128,128], index: 3, kind: input, shape index: {}]
  %s4 = inlined_call_operand.vmem [shape: f32[1,128], index: 4, kind: input, shape index: {}]
  %s5 = inlined_call_operand.vmem [shape: f32[16,128], index: 5, kind: output, shape index: {}]
  %s6 = sld [smem:[#allocation0]]
  $region53: #{position_wise_ff.1} parent=0
    _
  %s8 = ssub.s32 1, %s6
  %s9 = scalar_select 0, %s8, %s6
  loop: start=0, step=1, limit=4
  $region2: #{position_wise_ff.1} parent=0 // loop_pre_header
    _
  $region3: #{position_wise_ff.1} parent=0 // loop_header
    %s11 = sphi 0, %s15
    %p12 = scmp.ge.s32.totalorder %s11, 4
    %s21 = sphi 0, %s23
    %s24 = sphi 0, %s21
    %s25 = sphi 0, %s24
    %s41 = sphi 0, %s25
    %s45 = sphi 0, %s45
    %s47 = sphi 0, %s45
    %s48 = sphi 0, %s47
    %s62 = sphi 0, %s48
    %s66 = sphi 0, %s66
    %s68 = sphi 0, %s66
    %s69 = sphi 0, %s68
    %s83 = sphi 0, %s69
    %s87 = sphi 0, %s87
    %s89 = sphi 0, %s87
    %s90 = sphi 0, %s89
    %s104 = sphi 0, %s90
    %s108 = sphi 0, %s108
    %s110 = sphi 0, %s108
    %s111 = sphi 0, %s110
    %s125 = sphi 0, %s111
    %s131 = sphi 0, %s133
    %s134 = sphi 0, %s131
    %s135 = sphi 0, %s134
    %s151 = sphi 0, %s135
  $region4: #{position_wise_ff.1} parent=0 // loop_header_branch
    %14 = sbr.rel (%p12) target = $region8
  $region5: #{position_wise_ff.1} parent=0 // loop_body
    %s16 = ssub.s32 %s11, 1
    %s17 = ssub.s32 %s11, 2
    %s18 = sadd.s32 %s11, 1
    %s19 = ssub.s32 %s11, %s18
    %p20 = scmp.eq.s32.totalorder %s19, 0
    %s22 = sadd.s32 %s21, 1
    %s23 = scalar_select %p20, %s21, %s22
    %p26 = pneg %p20
    %p27 = scmp.eq.s32.totalorder %s11, 1
    %p28 = por %p26, %p27
    %p29 = scmp.ne.s32.totalorder %s21, %s24
    %p30 = scmp.eq.s32.totalorder %s11, 0
    %p31 = por %p29, %p30
    %p32 = scmp.ne.s32.totalorder %s21, %s24
    %p33 = scmp.eq.s32.totalorder %s16, 1
    %p34 = por %p32, %p33
    %p35 = scmp.ne.s32.totalorder %s24, %s25
    %p36 = scmp.eq.s32.totalorder %s16, 0
    %p37 = por %p35, %p36
    %p38 = scmp.ne.s32.totalorder %s24, %s25
    %p39 = scmp.eq.s32.totalorder %s17, 1
    %p40 = por %p38, %p39
    %p42 = scmp.ne.s32.totalorder %s25, %s41
    %p43 = scmp.eq.s32.totalorder %s17, 0
    %p44 = por %p42, %p43
    %s46 = sadd.s32 %s45, 1
    %p49 = scmp.eq.s32.totalorder %s11, 1
    %p50 = scmp.ne.s32.totalorder %s45, %s47
    %p51 = scmp.eq.s32.totalorder %s11, 0
    %p52 = por %p50, %p51
    %p53 = scmp.ne.s32.totalorder %s45, %s47
    %p54 = scmp.eq.s32.totalorder %s16, 1
    %p55 = por %p53, %p54
    %p56 = scmp.ne.s32.totalorder %s47, %s48
    %p57 = scmp.eq.s32.totalorder %s16, 0
    %p58 = por %p56, %p57
    %p59 = scmp.ne.s32.totalorder %s47, %s48
    %p60 = scmp.eq.s32.totalorder %s17, 1
    %p61 = por %p59, %p60
    %p63 = scmp.ne.s32.totalorder %s48, %s62
    %p64 = scmp.eq.s32.totalorder %s17, 0
    %p65 = por %p63, %p64
    %s67 = sadd.s32 %s66, 1
    %p70 = scmp.eq.s32.totalorder %s11, 1
    %p71 = scmp.ne.s32.totalorder %s66, %s68
    %p72 = scmp.eq.s32.totalorder %s11, 0
    %p73 = por %p71, %p72
    %p74 = scmp.ne.s32.totalorder %s66, %s68
    %p75 = scmp.eq.s32.totalorder %s16, 1
    %p76 = por %p74, %p75
    %p77 = scmp.ne.s32.totalorder %s68, %s69
    %p78 = scmp.eq.s32.totalorder %s16, 0
    %p79 = por %p77, %p78
    %p80 = scmp.ne.s32.totalorder %s68, %s69
    %p81 = scmp.eq.s32.totalorder %s17, 1
    %p82 = por %p80, %p81
    %p84 = scmp.ne.s32.totalorder %s69, %s83
    %p85 = scmp.eq.s32.totalorder %s17, 0
    %p86 = por %p84, %p85
    %s88 = sadd.s32 %s87, 1
    %p91 = scmp.eq.s32.totalorder %s11, 1
    %p92 = scmp.ne.s32.totalorder %s87, %s89
    %p93 = scmp.eq.s32.totalorder %s11, 0
    %p94 = por %p92, %p93
    %p95 = scmp.ne.s32.totalorder %s87, %s89
    %p96 = scmp.eq.s32.totalorder %s16, 1
    %p97 = por %p95, %p96
    %p98 = scmp.ne.s32.totalorder %s89, %s90
    %p99 = scmp.eq.s32.totalorder %s16, 0
    %p100 = por %p98, %p99
    %p101 = scmp.ne.s32.totalorder %s89, %s90
    %p102 = scmp.eq.s32.totalorder %s17, 1
    %p103 = por %p101, %p102
    %p105 = scmp.ne.s32.totalorder %s90, %s104
    %p106 = scmp.eq.s32.totalorder %s17, 0
    %p107 = por %p105, %p106
    %s109 = sadd.s32 %s108, 1
    %p112 = scmp.eq.s32.totalorder %s11, 1
    %p113 = scmp.ne.s32.totalorder %s108, %s110
    %p114 = scmp.eq.s32.totalorder %s11, 0
    %p115 = por %p113, %p114
    %p116 = scmp.ne.s32.totalorder %s108, %s110
    %p117 = scmp.eq.s32.totalorder %s16, 1
    %p118 = por %p116, %p117
    %p119 = scmp.ne.s32.totalorder %s110, %s111
    %p120 = scmp.eq.s32.totalorder %s16, 0
    %p121 = por %p119, %p120
    %p122 = scmp.ne.s32.totalorder %s110, %s111
    %p123 = scmp.eq.s32.totalorder %s17, 1
    %p124 = por %p122, %p123
    %p126 = scmp.ne.s32.totalorder %s111, %s125
    %p127 = scmp.eq.s32.totalorder %s17, 0
    %p128 = por %p126, %p127
    %s129 = ssub.s32 %s11, %s18
    %p130 = scmp.eq.s32.totalorder %s129, 0
    %s132 = sadd.s32 %s131, 1
    %s133 = scalar_select %p130, %s131, %s132
    %p136 = pneg %p130
    %p137 = scmp.eq.s32.totalorder %s11, 1
    %p138 = por %p136, %p137
    %p139 = scmp.ne.s32.totalorder %s131, %s134
    %p140 = scmp.eq.s32.totalorder %s11, 0
    %p141 = por %p139, %p140
    %p142 = scmp.ne.s32.totalorder %s131, %s134
    %p143 = scmp.eq.s32.totalorder %s16, 1
    %p144 = por %p142, %p143
    %p145 = scmp.ne.s32.totalorder %s134, %s135
    %p146 = scmp.eq.s32.totalorder %s16, 0
    %p147 = por %p145, %p146
    %p148 = scmp.ne.s32.totalorder %s134, %s135
    %p149 = scmp.eq.s32.totalorder %s17, 1
    %p150 = por %p148, %p149
    %p152 = scmp.ne.s32.totalorder %s135, %s151
    %p153 = scmp.eq.s32.totalorder %s17, 0
    %p154 = por %p152, %p153
    %p155 = scmp.le.s32.totalorder 1, %s11
    %p156 = scmp.lt.s32.totalorder %s11, 3
    %p157 = pnand %p155, %p156
    %p158 = pneg %p157
    // Predicated region
    $region9: #{position_wise_ff.1} parent=5 // pred_check
      _
    $region10: #{position_wise_ff.1} parent=5 // pred_check_branch
      %160 = sbr.rel (%p157) target = $region12
    $region11: #{position_wise_ff.1} parent=5 // pred_region
      %s161 = ssub.s32 %s11, 1
      // Predicated region
      $region13: #{position_wise_ff.1} parent=11 // pred_check
        %p162 = pneg %p58
      $region14: #{position_wise_ff.1} parent=11 // pred_check_branch
        %164 = sbr.rel (%p162) target = $region16
      $region15: #{position_wise_ff.1} parent=11 // pred_region
        _
      $region16: #{position_wise_ff.1} parent=11 // pred_fallthru
        _
      // Predicated region
      $region17: #{position_wise_ff.1} parent=11 // pred_check
        %p165 = pneg %p79
      $region18: #{position_wise_ff.1} parent=11 // pred_check_branch
        %167 = sbr.rel (%p165) target = $region20
      $region19: #{position_wise_ff.1} parent=11 // pred_region
        _
      $region20: #{position_wise_ff.1} parent=11 // pred_fallthru
        _
      // Predicated region
      $region21: #{position_wise_ff.1} parent=11 // pred_check
        %p168 = pneg %p100
      $region22: #{position_wise_ff.1} parent=11 // pred_check_branch
        %170 = sbr.rel (%p168) target = $region24
      $region23: #{position_wise_ff.1} parent=11 // pred_region
        _
      $region24: #{position_wise_ff.1} parent=11 // pred_fallthru
        _
      // Predicated region
      $region25: #{position_wise_ff.1} parent=11 // pred_check
        %p171 = pneg %p121
      $region26: #{position_wise_ff.1} parent=11 // pred_check_branch
        %173 = sbr.rel (%p171) target = $region28
      $region27: #{position_wise_ff.1} parent=11 // pred_region
        _
      $region28: #{position_wise_ff.1} parent=11 // pred_fallthru
        _
    $region12: #{position_wise_ff.1} parent=5 // pred_fallthru
      _
    %p174 = scmp.lt.s32.totalorder %s11, 2
    // Predicated region
    $region29: #{position_wise_ff.1} parent=5 // pred_check
      %p175 = pneg %p174
    $region30: #{position_wise_ff.1} parent=5 // pred_check_branch
      %177 = sbr.rel (%p175) target = $region32
    $region31: #{position_wise_ff.1} parent=5 // pred_region
      // Predicated region
      $region33: #{position_wise_ff.1} parent=31 // pred_check
        %p178 = pneg %p31
      $region34: #{position_wise_ff.1} parent=31 // pred_check_branch
        %180 = sbr.rel (%p178) target = $region36
      $region35: #{position_wise_ff.1} parent=31 // pred_region
        %p181 = scmp.lt.s32.totalorder %s11, 1
        %s182 = scalar_select %p181, %s11, 1
        %s183 = smul.addr %s182, 8
        %s184 = scalar_lea.vmem %s0, %s183
      $region36: #{position_wise_ff.1} parent=31 // pred_fallthru
        _
    $region32: #{position_wise_ff.1} parent=5 // pred_fallthru
      _
    %p185 = scmp.le.s32.totalorder 1, %s11
    %p186 = scmp.lt.s32.totalorder %s11, 3
    %p187 = pnand %p185, %p186
    %p188 = pneg %p187
    // Predicated region
    $region37: #{position_wise_ff.1} parent=5 // pred_check
      _
    $region38: #{position_wise_ff.1} parent=5 // pred_check_branch
      %190 = sbr.rel (%p187) target = $region40
    $region39: #{position_wise_ff.1} parent=5 // pred_region
      %s191 = ssub.s32 %s11, 1
      %p192 = scmp.lt.s32.totalorder %s16, 1
      %s193 = scalar_select %p192, %s16, 1
      %s194 = smul.addr %s193, 8
      %s195 = scalar_lea.vmem %s0, %s194
      %p196 = pneg %p37
      %p197 = pneg %p34
      %p198 = pneg %p58
      %p199 = pneg %p55
      %p200 = pneg %p79
      %p201 = pneg %p76
      %p202 = pneg %p100
      %p203 = pneg %p97
      %p204 = pneg %p121
      %p205 = pneg %p118
      %p206 = pneg %p147
      %p207 = pneg %p144
      %p208 = scmp.lt.s32.totalorder %s16, 1
      %s209 = scalar_select %p208, %s16, 1
      %s210 = smul.addr %s209, 8
      %s211 = scalar_lea.vmem %s5, %s210
      %p212 = scmp.lt.s32.totalorder %s16, 1
      %s213 = scalar_select %p212, %s16, 1
      %s214 = smul.addr %s213, 8
      %s215 = scalar_lea.vmem %s0, %s214
      %p216 = scmp.lt.s32.totalorder %s16, 1
      %s217 = scalar_select %p216, %s16, 1
      %s218 = smul.addr %s217, 8
      %s219 = scalar_lea.vmem %s5, %s218
      %v220 = vld [vmem:[%s215] sm:$0xff]
      %v221 = vld [vmem:[%s1] sm:$0xff]
      %v222 = vld [vmem:[%s1 + $0x8] sm:$0xff]
      %v223 = vld [vmem:[%s1 + $0x10] sm:$0xff]
      %v224 = vld [vmem:[%s1 + $0x18] sm:$0xff]
      %v225 = vld [vmem:[%s1 + $0x20] sm:$0xff]
      %v226 = vld [vmem:[%s1 + $0x28] sm:$0xff]
      %v227 = vld [vmem:[%s1 + $0x30] sm:$0xff]
      %v228 = vld [vmem:[%s1 + $0x38] sm:$0xff]
      %v229 = vld [vmem:[%s1 + $0x40] sm:$0xff]
      %v230 = vld [vmem:[%s1 + $0x48] sm:$0xff]
      %v231 = vld [vmem:[%s1 + $0x50] sm:$0xff]
      %v232 = vld [vmem:[%s1 + $0x58] sm:$0xff]
      %v233 = vld [vmem:[%s1 + $0x60] sm:$0xff]
      %v234 = vld [vmem:[%s1 + $0x68] sm:$0xff]
      %v235 = vld [vmem:[%s1 + $0x70] sm:$0xff]
      %v236 = vld [vmem:[%s1 + $0x78] sm:$0xff]
      %v237 = vld [vmem:[%s2] sm:$0x1]
      %v239 = vlaneseq
      %v240 = vshrl.u32 %v239, 7
      %v241 = vsub.s32 0, %v240
      %v242 = vrot.slane %v237, %v241
      %244 = vmatprep.subr.mxu0 0.0
      %245 = vmatpush1.msra.mxu0 %v221
      %246 = vmatprep.subr.mxu0 0.0
      %247 = vmatpush1.msra.mxu0 %v222
      %248 = vmatprep.subr.mxu0 0.0
      %249 = vmatpush1.msra.mxu0 %v223
      %250 = vmatprep.subr.mxu0 0.0
      %251 = vmatpush1.msra.mxu0 %v224
      %252 = vmatprep.subr.mxu0 0.0
      %253 = vmatpush1.msra.mxu0 %v225
      %254 = vmatprep.subr.mxu0 0.0
      %255 = vmatpush1.msra.mxu0 %v226
      %256 = vmatprep.subr.mxu0 0.0
      %257 = vmatpush1.msra.mxu0 %v227
      %258 = vmatprep.subr.mxu0 0.0
      %259 = vmatpush1.msra.mxu0 %v228
      %260 = vmatprep.subr.mxu0 0.0
      %261 = vmatpush1.msra.mxu0 %v229
      %262 = vmatprep.subr.mxu0 0.0
      %263 = vmatpush1.msra.mxu0 %v230
      %264 = vmatprep.subr.mxu0 0.0
      %265 = vmatpush1.msra.mxu0 %v231
      %266 = vmatprep.subr.mxu0 0.0
      %267 = vmatpush1.msra.mxu0 %v232
      %268 = vmatprep.subr.mxu0 0.0
      %269 = vmatpush1.msra.mxu0 %v233
      %270 = vmatprep.subr.mxu0 0.0
      %271 = vmatpush1.msra.mxu0 %v234
      %272 = vmatprep.subr.mxu0 0.0
      %273 = vmatpush1.msra.mxu0 %v235
      %274 = vmatprep.subr.mxu0 0.0
      %275 = vmatpush1.msra.mxu0 %v236
      %276 = vmatprep.subr.mxu0 0.0
      %277 = vmatpush1.msra.mxu0 0.0
      %278 = vmatprep.subr.mxu0 0.0
      %279 = vmatpush1.msra.mxu0 0.0
      %280 = vmatprep.subr.mxu0 0.0
      %281 = vmatpush1.msra.mxu0 0.0
      %282 = vmatprep.subr.mxu0 0.0
      %283 = vmatpush1.msra.mxu0 0.0
      %284 = vmatprep.subr.mxu0 0.0
      %285 = vmatpush1.msra.mxu0 0.0
      %286 = vmatprep.subr.mxu0 0.0
      %287 = vmatpush1.msra.mxu0 0.0
      %288 = vmatprep.subr.mxu0 0.0
      %289 = vmatpush1.msra.mxu0 0.0
      %290 = vmatprep.subr.mxu0 0.0
      %291 = vmatpush1.msra.mxu0 0.0
      %292 = vmatprep.subr.mxu0 0.0
      %293 = vmatpush1.msra.mxu0 0.0
      %294 = vmatprep.subr.mxu0 0.0
      %295 = vmatpush1.msra.mxu0 0.0
      %296 = vmatprep.subr.mxu0 0.0
      %297 = vmatpush1.msra.mxu0 0.0
      %298 = vmatprep.subr.mxu0 0.0
      %299 = vmatpush1.msra.mxu0 0.0
      %300 = vmatprep.subr.mxu0 0.0
      %301 = vmatpush1.msra.mxu0 0.0
      %302 = vmatprep.subr.mxu0 0.0
      %303 = vmatpush1.msra.mxu0 0.0
      %304 = vmatprep.subr.mxu0 0.0
      %305 = vmatpush1.msra.mxu0 0.0
      %306 = vmatprep.subr.mxu0 0.0
      %307 = vmatpush1.msra.mxu0 0.0
      %308 = vmatprep.mubr.f32.mxu0 0.0
      %309 = vmatmul.mubr.f32.gmra.mrb[0].mxu0 %v220
      %v310 = vpop.f32.mrb[0].mxu0
      %v311 = vadd.f32 %v242, %v310
      %v312 = vpop.f32.mrb[0].mxu0
      %313 = vdwg.mxu0
      %v314 = vld [vmem:[%s3] sm:$0xff]
      %v315 = vld [vmem:[%s3 + $0x8] sm:$0xff]
      %v316 = vld [vmem:[%s3 + $0x10] sm:$0xff]
      %v317 = vld [vmem:[%s3 + $0x18] sm:$0xff]
      %v318 = vld [vmem:[%s3 + $0x20] sm:$0xff]
      %v319 = vld [vmem:[%s3 + $0x28] sm:$0xff]
      %v320 = vld [vmem:[%s3 + $0x30] sm:$0xff]
      %v321 = vld [vmem:[%s3 + $0x38] sm:$0xff]
      %v322 = vld [vmem:[%s3 + $0x40] sm:$0xff]
      %v323 = vld [vmem:[%s3 + $0x48] sm:$0xff]
      %v324 = vld [vmem:[%s3 + $0x50] sm:$0xff]
      %v325 = vld [vmem:[%s3 + $0x58] sm:$0xff]
      %v326 = vld [vmem:[%s3 + $0x60] sm:$0xff]
      %v327 = vld [vmem:[%s3 + $0x68] sm:$0xff]
      %v328 = vld [vmem:[%s3 + $0x70] sm:$0xff]
      %v329 = vld [vmem:[%s3 + $0x78] sm:$0xff]
      %v330 = vld [vmem:[%s4] sm:$0x1]
      %v332 = vlaneseq
      %v333 = vshrl.u32 %v332, 7
      %v334 = vsub.s32 0, %v333
      %v335 = vrot.slane %v330, %v334
      %337 = vmatprep.subr.mxu0 0.0
      %338 = vmatpush1.msra.mxu0 %v314
      %339 = vmatprep.subr.mxu0 0.0
      %340 = vmatpush1.msra.mxu0 %v315
      %341 = vmatprep.subr.mxu0 0.0
      %342 = vmatpush1.msra.mxu0 %v316
      %343 = vmatprep.subr.mxu0 0.0
      %344 = vmatpush1.msra.mxu0 %v317
      %345 = vmatprep.subr.mxu0 0.0
      %346 = vmatpush1.msra.mxu0 %v318
      %347 = vmatprep.subr.mxu0 0.0
      %348 = vmatpush1.msra.mxu0 %v319
      %349 = vmatprep.subr.mxu0 0.0
      %350 = vmatpush1.msra.mxu0 %v320
      %351 = vmatprep.subr.mxu0 0.0
      %352 = vmatpush1.msra.mxu0 %v321
      %353 = vmatprep.subr.mxu0 0.0
      %354 = vmatpush1.msra.mxu0 %v322
      %355 = vmatprep.subr.mxu0 0.0
      %356 = vmatpush1.msra.mxu0 %v323
      %357 = vmatprep.subr.mxu0 0.0
      %358 = vmatpush1.msra.mxu0 %v324
      %359 = vmatprep.subr.mxu0 0.0
      %360 = vmatpush1.msra.mxu0 %v325
      %361 = vmatprep.subr.mxu0 0.0
      %362 = vmatpush1.msra.mxu0 %v326
      %363 = vmatprep.subr.mxu0 0.0
      %364 = vmatpush1.msra.mxu0 %v327
      %365 = vmatprep.subr.mxu0 0.0
      %366 = vmatpush1.msra.mxu0 %v328
      %367 = vmatprep.subr.mxu0 0.0
      %368 = vmatpush1.msra.mxu0 %v329
      %369 = vmatprep.subr.mxu0 0.0
      %370 = vmatpush1.msra.mxu0 0.0
      %371 = vmatprep.subr.mxu0 0.0
      %372 = vmatpush1.msra.mxu0 0.0
      %373 = vmatprep.subr.mxu0 0.0
      %374 = vmatpush1.msra.mxu0 0.0
      %375 = vmatprep.subr.mxu0 0.0
      %376 = vmatpush1.msra.mxu0 0.0
      %377 = vmatprep.subr.mxu0 0.0
      %378 = vmatpush1.msra.mxu0 0.0
      %379 = vmatprep.subr.mxu0 0.0
      %380 = vmatpush1.msra.mxu0 0.0
      %381 = vmatprep.subr.mxu0 0.0
      %382 = vmatpush1.msra.mxu0 0.0
      %383 = vmatprep.subr.mxu0 0.0
      %384 = vmatpush1.msra.mxu0 0.0
      %385 = vmatprep.subr.mxu0 0.0
      %386 = vmatpush1.msra.mxu0 0.0
      %387 = vmatprep.subr.mxu0 0.0
      %388 = vmatpush1.msra.mxu0 0.0
      %389 = vmatprep.subr.mxu0 0.0
      %390 = vmatpush1.msra.mxu0 0.0
      %391 = vmatprep.subr.mxu0 0.0
      %392 = vmatpush1.msra.mxu0 0.0
      %393 = vmatprep.subr.mxu0 0.0
      %394 = vmatpush1.msra.mxu0 0.0
      %395 = vmatprep.subr.mxu0 0.0
      %396 = vmatpush1.msra.mxu0 0.0
      %397 = vmatprep.subr.mxu0 0.0
      %398 = vmatpush1.msra.mxu0 0.0
      %399 = vmatprep.subr.mxu0 0.0
      %400 = vmatpush1.msra.mxu0 0.0
      %401 = vmatprep.mubr.f32.mxu0 0.0
      %402 = vmatmul.mubr.f32.gmra.mrb[0].mxu0 %v311
      %v403 = vpop.f32.mrb[0].mxu0
      %v404 = vadd.f32 %v335, %v403
      %v405 = vpop.f32.mrb[0].mxu0
      %406 = vdwg.mxu0
      %v407 = vmax.f32 %v404, 0.0
      %408 = vst [vmem:[%s219] sm:$0xff] %v407
      %p409 = scmp.lt.s32.totalorder %s16, 1
      %s410 = scalar_select %p409, %s16, 1
      %s411 = smul.addr %s410, 8
      %s412 = scalar_lea.vmem %s5, %s411
      // Predicated region
      $region41: #{position_wise_ff.1} parent=39 // pred_check
        %p413 = pneg %p144
      $region42: #{position_wise_ff.1} parent=39 // pred_check_branch
        %415 = sbr.rel (%p413) target = $region44
      $region43: #{position_wise_ff.1} parent=39 // pred_region
        _
      $region44: #{position_wise_ff.1} parent=39 // pred_fallthru
        _
    $region40: #{position_wise_ff.1} parent=5 // pred_fallthru
      _
    %p416 = scmp.le.s32.totalorder 2, %s11
    // Predicated region
    $region45: #{position_wise_ff.1} parent=5 // pred_check
      %p417 = pneg %p416
    $region46: #{position_wise_ff.1} parent=5 // pred_check_branch
      %419 = sbr.rel (%p417) target = $region48
    $region47: #{position_wise_ff.1} parent=5 // pred_region
      %s420 = ssub.s32 %s11, 2
      // Predicated region
      $region49: #{position_wise_ff.1} parent=47 // pred_check
        %p421 = pneg %p150
      $region50: #{position_wise_ff.1} parent=47 // pred_check_branch
        %423 = sbr.rel (%p421) target = $region52
      $region51: #{position_wise_ff.1} parent=47 // pred_region
        %p424 = scmp.lt.s32.totalorder %s17, 1
        %s425 = scalar_select %p424, %s17, 1
        %s426 = smul.addr %s425, 8
        %s427 = scalar_lea.vmem %s5, %s426
      $region52: #{position_wise_ff.1} parent=47 // pred_fallthru
        _
    $region48: #{position_wise_ff.1} parent=5 // pred_fallthru
      _
  $region6: #{position_wise_ff.1} parent=0 // loop_footer
    %s15 = sadd.s32 1, %s11
  $region7: #{position_wise_ff.1} parent=0 // loop_footer_branch
    %10 = sbr.rel target = $region3
  $region8: #{position_wise_ff.1} parent=0 // loop_exit
    _

</llo_original>
